<compile_context>
chip_gen: v7x
topology: tpu7x:2x2x1
jax: 0.10.0
libtpu: 0.0.40
codegen_flags: <defaults>
</compile_context>

<pallas_src>
import jax
import jax.numpy as jnp
from jax import lax
from jax.experimental import pallas as pl
from jax.experimental.pallas import tpu as pltpu


def relu_autoencoder_kernel(x_ref, w_ref, b_enc_ref, bias_ref, out_ref):
    # x_ref:     (TB, n_dim)    f32  (batch tile)
    # w_ref:     (h_dim, n_dim) bf16 (VMEM-resident across grid steps)
    # b_enc_ref: (1, h_dim)     f32
    # bias_ref:  (1, n_dim)     f32
    # out_ref:   (TB, n_dim)
    w = w_ref[...]
    x = x_ref[...].astype(w.dtype)

    # Encoder: h = x @ W.T + b_enc -> (TB, h_dim).
    # Contract on W's LAST dim directly (trans_b matmul, MXU-native: no
    # transpose copy / per-step relayout of W).
    h = lax.dot_general(
        x, w,
        dimension_numbers=(((1,), (1,)), ((), ())),
        preferred_element_type=jnp.float32,
    ) + b_enc_ref[...]

    # Decoder (tied weights): x_recon = relu(h @ W + bias) -> (TB, n_dim).
    y = lax.dot_general(
        h.astype(w.dtype), w,
        dimension_numbers=(((1,), (0,)), ((), ())),
        preferred_element_type=jnp.float32,
    ) + bias_ref[...]

    out_ref[...] = jnp.maximum(y, 0.0).astype(out_ref.dtype)


def _round_up(x, m):
    return ((x + m - 1) // m) * m


def _pick_batch_tile(batch, n_dim, x_itemsize=4, target_bytes=2 << 20, max_tb=8192):
    """Batch-tile rows chosen by bytes (~target_bytes of x per tile)."""
    row_bytes = max(1, n_dim * x_itemsize)
    tb = max(16, target_bytes // row_bytes)
    # Prefer MXU-M alignment (256), else 128, else 16 (bf16 sublane packing).
    for align in (256, 128, 16):
        if tb >= align:
            tb = (tb // align) * align
            break
    tb = min(tb, max_tb)
    # Never tile beyond the (16-aligned) padded batch.
    tb = min(tb, _round_up(batch, 16))
    return int(tb)


def relu_autoencoder_forward(x, w, b_enc, bias, *, block_b=None,
                             matmul_dtype=jnp.bfloat16, out_dtype=None):
    """x: (B, n_dim) f32; w: (h_dim, n_dim); b_enc: (h_dim,); bias: (n_dim,).

    Numerics note: matmul inputs are cast to bf16 (f32 MXU accumulation);
    bias-add + ReLU happen in f32.  Pass matmul_dtype=jnp.float32 for
    f32-exact nn.Linear semantics.  out_dtype=jnp.bfloat16 halves the output
    write traffic if callers can accept it (default keeps x.dtype).
    """
    B, n_dim = x.shape
    h_dim = w.shape[0]
    out_dtype = x.dtype if out_dtype is None else out_dtype

    # ---- batch tile (bytes-based) + sublane alignment ----
    if block_b is not None:
        tb = _round_up(int(block_b), 16)
    else:
        tb = _pick_batch_tile(B, n_dim, x_itemsize=x.dtype.itemsize)

    # ---- per-generation VMEM cap ----
    try:
        phys_vmem = int(pltpu.get_tpu_info().vmem_capacity_bytes)
    except Exception:
        phys_vmem = 64 << 20  # conservative (v7x per-TC VMEM)
    headroom = (16 << 20) if phys_vmem >= (128 << 20) else (8 << 20)
    vmem_cap = phys_vmem - headroom

    w_bytes = h_dim * n_dim * jnp.dtype(matmul_dtype).itemsize
    bias_bytes = (h_dim + n_dim) * 4

    def plan_bytes(tb_):
        x_tile = tb_ * n_dim * x.dtype.itemsize
        o_tile = tb_ * n_dim * jnp.dtype(out_dtype).itemsize
        # Live in-kernel intermediates: bf16 x, f32 h, bf16 h, f32 y.
        live = tb_ * n_dim * (2 + 4) + tb_ * h_dim * (4 + 2)
        # x/out double-buffered; W & biases single-buffered (Buffered(1)).
        return 2 * (x_tile + o_tile) + w_bytes + bias_bytes + live

    # Shrink the batch tile until the plan fits the generation's VMEM cap.
    while plan_bytes(tb) + (4 << 20) > vmem_cap and tb > 16:
        tb = max(16, ((tb // 2) // 16) * 16)

    if w_bytes + bias_bytes + (4 << 20) > vmem_cap:
        # TODO(synk): K-tiled (n_dim contraction) fallback for W too large for VMEM.
        raise ValueError(
            f"Resident weight ({w_bytes} B) does not fit VMEM cap ({vmem_cap} B); "
            "K-tiled fallback not implemented."
        )

    vmem_limit = int(min(vmem_cap, max(32 << 20, plan_bytes(tb) + (4 << 20))))

    # ---- pad the batch to a multiple of the tile ----
    B_pad = _round_up(B, tb)
    x_in = jnp.pad(x, ((0, B_pad - B), (0, 0))) if B_pad != B else x
    grid = (B_pad // tb,)

    # Weight resident in bf16 (halves VMEM footprint + HBM fill traffic);
    # biases stay f32 (added after f32 accumulation).
    w_mx = w.astype(matmul_dtype)
    b_enc_2d = b_enc.reshape(1, h_dim).astype(jnp.float32)
    bias_2d = bias.reshape(1, n_dim).astype(jnp.float32)

    def _call(use_buffered):
        def resident(shape):
            if use_buffered:
                # Constant index_map -> single-buffer: frees ~w_bytes of VMEM.
                return pl.BlockSpec(shape, lambda i: (0, 0),
                                    pipeline_mode=pl.Buffered(1))
            return pl.BlockSpec(shape, lambda i: (0, 0))

        return pl.pallas_call(
            relu_autoencoder_kernel,
            out_shape=jax.ShapeDtypeStruct((B_pad, n_dim), out_dtype),
            grid_spec=pltpu.PrefetchScalarGridSpec(
                num_scalar_prefetch=0,
                grid=grid,
                in_specs=[
                    pl.BlockSpec((tb, n_dim), lambda i: (i, 0)),   # x: batch-tiled
                    resident((h_dim, n_dim)),                      # W: resident
                    resident((1, h_dim)),                          # b_enc: resident
                    resident((1, n_dim)),                          # bias: resident
                ],
                out_specs=pl.BlockSpec((tb, n_dim), lambda i: (i, 0)),
            ),
            compiler_params=pltpu.CompilerParams(
                dimension_semantics=("parallel",),  # dual-TC on v7x, no-op elsewhere
                vmem_limit_bytes=vmem_limit,
            ),
        )(x_in, w_mx, b_enc_2d, bias_2d)

    try:
        out = _call(True)
    except Exception:
        # Older jax without pipeline_mode / Buffered(1) support.
        out = _call(False)

    return out if B_pad == B else out[:B]


if __name__ == "__main__":
    # Small shapes consistent with the module: n_dim features -> h_dim bottleneck.
    batch, n_dim, h_dim = 256, 32, 16

    key = jax.random.PRNGKey(0)
    kx, kw, kb = jax.random.split(key, 3)

    # Deterministic params mirroring the module's __init__:
    #   encoder.weight ~ N(0, 0.001), encoder.bias ~ U(-1/sqrt(n_dim), 1/sqrt(n_dim)),
    #   self.bias = zeros(n_dim).
    x = jax.random.normal(kx, (batch, n_dim), dtype=jnp.float32)
    w = 0.001 * jax.random.normal(kw, (h_dim, n_dim), dtype=jnp.float32)
    b_enc = (1.0 / jnp.sqrt(n_dim)) * jax.random.uniform(
        kb, (h_dim,), dtype=jnp.float32, minval=-1.0, maxval=1.0
    )
    bias = jnp.zeros((n_dim,), dtype=jnp.float32)

    w_bf = w.astype(jnp.bfloat16)

    def ref_bf16(xv):
        # Replicates the kernel's numerics (bf16 matmul inputs, f32 accumulation).
        h = lax.dot_general(
            xv.astype(jnp.bfloat16), w_bf,
            dimension_numbers=(((1,), (1,)), ((), ())),
            preferred_element_type=jnp.float32,
        ) + b_enc
        y = lax.dot_general(
            h.astype(jnp.bfloat16), w_bf,
            dimension_numbers=(((1,), (0,)), ((), ())),
            preferred_element_type=jnp.float32,
        ) + bias
        return jnp.maximum(y, 0.0)

    def ref_f32(xv):
        # Pure-f32 module semantics.
        return jnp.maximum((xv @ w.T + b_enc) @ w + bias, 0.0)

    # 1) Default tile plan (single grid step at this small shape -> no per-step
    #    overhead, as recommended for the small-n_dim regime).
    out = jax.block_until_ready(relu_autoencoder_forward(x, w, b_enc, bias))
    assert out.shape == (batch, n_dim)
    assert jnp.allclose(out, ref_bf16(x), atol=1e-6, rtol=1e-5), (
        "kernel vs bf16-replicated reference mismatch: "
        f"{float(jnp.max(jnp.abs(out - ref_bf16(x))))}"
    )
    assert jnp.allclose(out, ref_f32(x), atol=1e-4, rtol=1e-2), (
        "kernel vs f32 reference mismatch: "
        f"{float(jnp.max(jnp.abs(out - ref_f32(x))))}"
    )

    # 2) Explicit smaller tile -> multi-step pipelined grid (exercises the
    #    batch-tiled path; rows are independent so results must match).
    out_tiled = jax.block_until_ready(
        relu_autoencoder_forward(x, w, b_enc, bias, block_b=64)
    )
    assert jnp.allclose(out_tiled, out, atol=1e-6), "tiled vs single-step mismatch"

    # 3) Batch not divisible by the tile -> wrapper padding path.
    x_odd = x[:200]
    out_odd = jax.block_until_ready(relu_autoencoder_forward(x_odd, w, b_enc, bias))
    assert out_odd.shape == (200, n_dim)
    assert jnp.allclose(out_odd, ref_bf16(x_odd), atol=1e-6, rtol=1e-5), (
        "padded-batch kernel vs reference mismatch"
    )

    print("KERNEL_OK")
</pallas_src>

<mosaic_0001>
module attributes {stable_mosaic.version = 11 : i64} {
  func.func @relu_autoencoder_kernel(%arg0: i32, %arg1: memref<256x32xf32, #tpu.memory_space<vmem>>, %arg2: memref<16x32xbf16, #tpu.memory_space<vmem>>, %arg3: memref<1x16xf32, #tpu.memory_space<vmem>>, %arg4: memref<1x32xf32, #tpu.memory_space<vmem>>, %arg5: memref<256x32xf32, #tpu.memory_space<vmem>>) attributes {dimension_semantics = [#tpu.dimension_semantics<parallel>], iteration_bounds = array<i64: 1>, scalar_prefetch = 0 : i64, scratch_operands = 0 : i64, tpu.core_type = #tpu.core_type<tc>, window_params = [{transform_indices = @transform_0, window_bounds = array<i64: 256, 32>}, {pipeline_mode = #tpu.pipeline_mode<synchronous>, transform_indices = @transform_1, window_bounds = array<i64: 16, 32>}, {pipeline_mode = #tpu.pipeline_mode<synchronous>, transform_indices = @transform_2, window_bounds = array<i64: 1, 16>}, {pipeline_mode = #tpu.pipeline_mode<synchronous>, transform_indices = @transform_3, window_bounds = array<i64: 1, 32>}, {transform_indices = @transform_4, window_bounds = array<i64: 256, 32>}]} {
    %c0 = arith.constant 0 : index
    %c0_0 = arith.constant 0 : index
    %0 = vector.load %arg2[%c0, %c0_0] : memref<16x32xbf16, #tpu.memory_space<vmem>>, vector<16x32xbf16>
    %c0_1 = arith.constant 0 : index
    %c0_2 = arith.constant 0 : index
    %1 = vector.load %arg1[%c0_1, %c0_2] : memref<256x32xf32, #tpu.memory_space<vmem>>, vector<256x32xf32>
    %2 = arith.truncf %1 : vector<256x32xf32> to vector<256x32xbf16>
    %cst = arith.constant dense<0.000000e+00> : vector<256x16xf32>
    %3 = tpu.matmul %2, %0, %cst {dimension_numbers = #tpu.dot_dimension_numbers<[1], [1], [0], [0], [0, 0, 1, 0], [], []>} : vector<256x32xbf16>, vector<16x32xbf16>, vector<256x16xf32> -> vector<256x16xf32>
    %c0_3 = arith.constant 0 : index
    %c0_4 = arith.constant 0 : index
    %4 = vector.load %arg3[%c0_3, %c0_4] : memref<1x16xf32, #tpu.memory_space<vmem>>, vector<1x16xf32>
    %5 = vector.broadcast %4 : vector<1x16xf32> to vector<256x16xf32>
    %6 = arith.addf %3, %5 : vector<256x16xf32>
    %7 = arith.truncf %6 : vector<256x16xf32> to vector<256x16xbf16>
    %cst_5 = arith.constant dense<0.000000e+00> : vector<256x32xf32>
    %8 = tpu.matmul %7, %0, %cst_5 {dimension_numbers = #tpu.dot_dimension_numbers<[1], [0], [0], [1], [0, 0, 1, 1], [], []>} : vector<256x16xbf16>, vector<16x32xbf16>, vector<256x32xf32> -> vector<256x32xf32>
    %c0_6 = arith.constant 0 : index
    %c0_7 = arith.constant 0 : index
    %9 = vector.load %arg4[%c0_6, %c0_7] : memref<1x32xf32, #tpu.memory_space<vmem>>, vector<1x32xf32>
    %10 = vector.broadcast %9 : vector<1x32xf32> to vector<256x32xf32>
    %11 = arith.addf %8, %10 : vector<256x32xf32>
    %cst_8 = arith.constant 0.000000e+00 : f32
    %12 = vector.broadcast %cst_8 : f32 to vector<256x32xf32>
    %13 = arith.maximumf %11, %12 : vector<256x32xf32>
    %c0_9 = arith.constant 0 : index
    %c0_10 = arith.constant 0 : index
    %14 = vector.load %arg5[%c0_9, %c0_10] : memref<256x32xf32, #tpu.memory_space<vmem>>, vector<256x32xf32>
    tpu.vector_store %arg5[%c0_9, %c0_10], %13 {strides = array<i32>} : memref<256x32xf32, #tpu.memory_space<vmem>>, vector<256x32xf32>,
    return
  }
  func.func @transform_0(%arg0: i32) -> (i32, i32) {
    %c0_i32 = arith.constant 0 : i32
    %c0_i32_0 = arith.constant 0 : i32
    return %arg0, %c0_i32 : i32, i32
  }
  func.func @transform_1(%arg0: i32) -> (i32, i32) {
    %c0_i32 = arith.constant 0 : i32
    %c0_i32_0 = arith.constant 0 : i32
    %c0_i32_1 = arith.constant 0 : i32
    return %c0_i32, %c0_i32_0 : i32, i32
  }
  func.func @transform_2(%arg0: i32) -> (i32, i32) {
    %c0_i32 = arith.constant 0 : i32
    %c0_i32_0 = arith.constant 0 : i32
    %c0_i32_1 = arith.constant 0 : i32
    return %c0_i32, %c0_i32_0 : i32, i32
  }
  func.func @transform_3(%arg0: i32) -> (i32, i32) {
    %c0_i32 = arith.constant 0 : i32
    %c0_i32_0 = arith.constant 0 : i32
    %c0_i32_1 = arith.constant 0 : i32
    return %c0_i32, %c0_i32_0 : i32, i32
  }
  func.func @transform_4(%arg0: i32) -> (i32, i32) {
    %c0_i32 = arith.constant 0 : i32
    %c0_i32_0 = arith.constant 0 : i32
    return %arg0, %c0_i32 : i32, i32
  }
}

module attributes {stable_mosaic.version = 11 : i64} {
  func.func @relu_autoencoder_kernel(%arg0: i32, %arg1: memref<256x32xf32, #tpu.memory_space<vmem>>, %arg2: memref<16x32xbf16, #tpu.memory_space<vmem>>, %arg3: memref<1x16xf32, #tpu.memory_space<vmem>>, %arg4: memref<1x32xf32, #tpu.memory_space<vmem>>, %arg5: memref<256x32xf32, #tpu.memory_space<vmem>>) attributes {dimension_semantics = [#tpu.dimension_semantics<parallel>], iteration_bounds = array<i64: 1>, scalar_prefetch = 0 : i64, scratch_operands = 0 : i64, tpu.core_type = #tpu.core_type<tc>, window_params = [{transform_indices = @transform_0, window_bounds = array<i64: 256, 32>}, {pipeline_mode = #tpu.pipeline_mode<synchronous>, transform_indices = @transform_1, window_bounds = array<i64: 16, 32>}, {pipeline_mode = #tpu.pipeline_mode<synchronous>, transform_indices = @transform_2, window_bounds = array<i64: 1, 16>}, {pipeline_mode = #tpu.pipeline_mode<synchronous>, transform_indices = @transform_3, window_bounds = array<i64: 1, 32>}, {transform_indices = @transform_4, window_bounds = array<i64: 256, 32>}]} {
    %c0 = arith.constant 0 : index
    %c0_0 = arith.constant 0 : index
    %0 = vector.load %arg2[%c0, %c0_0] : memref<16x32xbf16, #tpu.memory_space<vmem>>, vector<16x32xbf16>
    %c0_1 = arith.constant 0 : index
    %c0_2 = arith.constant 0 : index
    %1 = vector.load %arg1[%c0_1, %c0_2] : memref<256x32xf32, #tpu.memory_space<vmem>>, vector<256x32xf32>
    %2 = arith.truncf %1 : vector<256x32xf32> to vector<256x32xbf16>
    %cst = arith.constant dense<0.000000e+00> : vector<256x16xf32>
    %3 = tpu.matmul %2, %0, %cst {dimension_numbers = #tpu.dot_dimension_numbers<[1], [1], [0], [0], [0, 0, 1, 0], [], []>} : vector<256x32xbf16>, vector<16x32xbf16>, vector<256x16xf32> -> vector<256x16xf32>
    %c0_3 = arith.constant 0 : index
    %c0_4 = arith.constant 0 : index
    %4 = vector.load %arg3[%c0_3, %c0_4] : memref<1x16xf32, #tpu.memory_space<vmem>>, vector<1x16xf32>
    %5 = vector.broadcast %4 : vector<1x16xf32> to vector<256x16xf32>
    %6 = arith.addf %3, %5 : vector<256x16xf32>
    %7 = arith.truncf %6 : vector<256x16xf32> to vector<256x16xbf16>
    %cst_5 = arith.constant dense<0.000000e+00> : vector<256x32xf32>
    %8 = tpu.matmul %7, %0, %cst_5 {dimension_numbers = #tpu.dot_dimension_numbers<[1], [0], [0], [1], [0, 0, 1, 1], [], []>} : vector<256x16xbf16>, vector<16x32xbf16>, vector<256x32xf32> -> vector<256x32xf32>
    %c0_6 = arith.constant 0 : index
    %c0_7 = arith.constant 0 : index
    %9 = vector.load %arg4[%c0_6, %c0_7] : memref<1x32xf32, #tpu.memory_space<vmem>>, vector<1x32xf32>
    %10 = vector.broadcast %9 : vector<1x32xf32> to vector<256x32xf32>
    %11 = arith.addf %8, %10 : vector<256x32xf32>
    %cst_8 = arith.constant 0.000000e+00 : f32
    %12 = vector.broadcast %cst_8 : f32 to vector<256x32xf32>
    %13 = arith.maximumf %11, %12 : vector<256x32xf32>
    %c0_9 = arith.constant 0 : index
    %c0_10 = arith.constant 0 : index
    %14 = vector.load %arg5[%c0_9, %c0_10] : memref<256x32xf32, #tpu.memory_space<vmem>>, vector<256x32xf32>
    tpu.vector_store %arg5[%c0_9, %c0_10], %13 {strides = array<i32>} : memref<256x32xf32, #tpu.memory_space<vmem>>, vector<256x32xf32>,
    return
  }
  func.func @transform_0(%arg0: i32) -> (i32, i32) {
    %c0_i32 = arith.constant 0 : i32
    %c0_i32_0 = arith.constant 0 : i32
    return %arg0, %c0_i32 : i32, i32
  }
  func.func @transform_1(%arg0: i32) -> (i32, i32) {
    %c0_i32 = arith.constant 0 : i32
    %c0_i32_0 = arith.constant 0 : i32
    %c0_i32_1 = arith.constant 0 : i32
    return %c0_i32, %c0_i32_0 : i32, i32
  }
  func.func @transform_2(%arg0: i32) -> (i32, i32) {
    %c0_i32 = arith.constant 0 : i32
    %c0_i32_0 = arith.constant 0 : i32
    %c0_i32_1 = arith.constant 0 : i32
    return %c0_i32, %c0_i32_0 : i32, i32
  }
  func.func @transform_3(%arg0: i32) -> (i32, i32) {
    %c0_i32 = arith.constant 0 : i32
    %c0_i32_0 = arith.constant 0 : i32
    %c0_i32_1 = arith.constant 0 : i32
    return %c0_i32, %c0_i32_0 : i32, i32
  }
  func.func @transform_4(%arg0: i32) -> (i32, i32) {
    %c0_i32 = arith.constant 0 : i32
    %c0_i32_0 = arith.constant 0 : i32
    return %arg0, %c0_i32 : i32, i32
  }
}

</mosaic_0001>

<llo_original>
// kernel: tpu_custom_call.1
$region0: #{tpu_custom_call.1}
  #allocation0 [shape = 'u32[]', space=smem, size = 0x4, offset = 0x4, fixed_abs, tag = 'smem constant byte address 0x4 - core index']
  #allocation1 [shape = 'u32[144,128]{1,0:T(1,128)}', space=vmem, size = 0x12000, scoped, tag = 'internal scratch']
  %s0 = inlined_call_operand.vmem [shape: f32[256,32], index: 0, kind: input, shape index: {}]
  %s1 = inlined_call_operand.vmem [shape: bf16[16,32], index: 1, kind: input, shape index: {}]
  %s2 = inlined_call_operand.vmem [shape: f32[1,16], index: 2, kind: input, shape index: {}]
  %s3 = inlined_call_operand.vmem [shape: f32[1,32], index: 3, kind: input, shape index: {}]
  %s4 = inlined_call_operand.vmem [shape: f32[256,32], index: 4, kind: output, shape index: {}]
  %s5 = sld [smem:[#allocation0]]
  $region26: #{tpu_custom_call.1} parent=0
    _
  %s7 = ssub.s32 1, %s5
  %s8 = scalar_select 0, %s7, %s5
  // Predicated region
  $region2: #{tpu_custom_call.1} parent=0 // pred_check
    _
  $region3: #{tpu_custom_call.1} parent=0 // pred_check_branch
    %10 = sbr.rel (0) target = $region5
  $region4: #{tpu_custom_call.1} parent=0 // pred_region
    _
  $region5: #{tpu_custom_call.1} parent=0 // pred_fallthru
    _
  // Predicated region
  $region6: #{tpu_custom_call.1} parent=0 // pred_check
    _
  $region7: #{tpu_custom_call.1} parent=0 // pred_check_branch
    %12 = sbr.rel (0) target = $region9
  $region8: #{tpu_custom_call.1} parent=0 // pred_region
    _
  $region9: #{tpu_custom_call.1} parent=0 // pred_fallthru
    _
  // Predicated region
  $region10: #{tpu_custom_call.1} parent=0 // pred_check
    _
  $region11: #{tpu_custom_call.1} parent=0 // pred_check_branch
    %14 = sbr.rel (0) target = $region13
  $region12: #{tpu_custom_call.1} parent=0 // pred_region
    _
  $region13: #{tpu_custom_call.1} parent=0 // pred_fallthru
    _
  // Predicated region
  $region14: #{tpu_custom_call.1} parent=0 // pred_check
    _
  $region15: #{tpu_custom_call.1} parent=0 // pred_check_branch
    %16 = sbr.rel (0) target = $region17
  $region16: #{tpu_custom_call.1} parent=0 // pred_region
    _
  $region17: #{tpu_custom_call.1} parent=0 // pred_fallthru
    _
  %v18 = vld [vmem:[%s1] sm:$0xf]
  %v19 = vld [vmem:[%s1 + $0x4] sm:$0xf]
  %v20 = vld [vmem:[%s0] sm:$0xff]
  %v21 = vld [vmem:[%s0 + $0x8] sm:$0xff]
  %v22 = vld [vmem:[%s0 + $0x10] sm:$0xff]
  %v23 = vld [vmem:[%s0 + $0x18] sm:$0xff]
  %v24 = vld [vmem:[%s0 + $0x20] sm:$0xff]
  %v25 = vld [vmem:[%s0 + $0x28] sm:$0xff]
  %v26 = vld [vmem:[%s0 + $0x30] sm:$0xff]
  %v27 = vld [vmem:[%s0 + $0x38] sm:$0xff]
  %v28 = vld [vmem:[%s0 + $0x40] sm:$0xff]
  %v29 = vld [vmem:[%s0 + $0x48] sm:$0xff]
  %v30 = vld [vmem:[%s0 + $0x50] sm:$0xff]
  %v31 = vld [vmem:[%s0 + $0x58] sm:$0xff]
  %v32 = vld [vmem:[%s0 + $0x60] sm:$0xff]
  %v33 = vld [vmem:[%s0 + $0x68] sm:$0xff]
  %v34 = vld [vmem:[%s0 + $0x70] sm:$0xff]
  %v35 = vld [vmem:[%s0 + $0x78] sm:$0xff]
  %v36 = vld [vmem:[%s0 + $0x80] sm:$0xff]
  %v37 = vld [vmem:[%s0 + $0x88] sm:$0xff]
  %v38 = vld [vmem:[%s0 + $0x90] sm:$0xff]
  %v39 = vld [vmem:[%s0 + $0x98] sm:$0xff]
  %v40 = vld [vmem:[%s0 + $0xa0] sm:$0xff]
  %v41 = vld [vmem:[%s0 + $0xa8] sm:$0xff]
  %v42 = vld [vmem:[%s0 + $0xb0] sm:$0xff]
  %v43 = vld [vmem:[%s0 + $0xb8] sm:$0xff]
  %v44 = vld [vmem:[%s0 + $0xc0] sm:$0xff]
  %v45 = vld [vmem:[%s0 + $0xc8] sm:$0xff]
  %v46 = vld [vmem:[%s0 + $0xd0] sm:$0xff]
  %v47 = vld [vmem:[%s0 + $0xd8] sm:$0xff]
  %v48 = vld [vmem:[%s0 + $0xe0] sm:$0xff]
  %v49 = vld [vmem:[%s0 + $0xe8] sm:$0xff]
  %v50 = vld [vmem:[%s0 + $0xf0] sm:$0xff]
  %v51 = vld [vmem:[%s0 + $0xf8] sm:$0xff]
  %v52 = vpack.c.bf16 %v21, %v20
  %v53 = vpack.c.bf16 %v23, %v22
  %v54 = vpack.c.bf16 %v25, %v24
  %v55 = vpack.c.bf16 %v27, %v26
  %v56 = vpack.c.bf16 %v29, %v28
  %v57 = vpack.c.bf16 %v31, %v30
  %v58 = vpack.c.bf16 %v33, %v32
  %v59 = vpack.c.bf16 %v35, %v34
  %v60 = vpack.c.bf16 %v37, %v36
  %v61 = vpack.c.bf16 %v39, %v38
  %v62 = vpack.c.bf16 %v41, %v40
  %v63 = vpack.c.bf16 %v43, %v42
  %v64 = vpack.c.bf16 %v45, %v44
  %v65 = vpack.c.bf16 %v47, %v46
  %v66 = vpack.c.bf16 %v49, %v48
  %v67 = vpack.c.bf16 %v51, %v50
  %v68 = vld [vmem:[%s2] sm:$0x1]
  %v70 = vlaneseq
  %v71 = vshrl.u32 %v70, 7
  %v72 = vsub.s32 0, %v71
  %v73 = vrot.slane %v68, %v72
  %v77 = vunpack.c.l.b16 %v18
  %v78 = vunpack.c.l.b16 %v19
  %v79 = vpack.c.b16 %v78, %v77
  %vm80 = vcmask 261120
  %v82 = vsel %vm80, %v52, 0
  %v85 = vsel %vm80, %v53, 0
  %v88 = vsel %vm80, %v54, 0
  %v91 = vsel %vm80, %v55, 0
  %v94 = vsel %vm80, %v56, 0
  %v97 = vsel %vm80, %v57, 0
  %v100 = vsel %vm80, %v58, 0
  %v103 = vsel %vm80, %v59, 0
  %v106 = vsel %vm80, %v60, 0
  %v109 = vsel %vm80, %v61, 0
  %v112 = vsel %vm80, %v62, 0
  %v115 = vsel %vm80, %v63, 0
  %v118 = vsel %vm80, %v64, 0
  %v121 = vsel %vm80, %v65, 0
  %v124 = vsel %vm80, %v66, 0
  %v127 = vsel %vm80, %v67, 0
  %v130 = vsel %vm80, %v79, 0
  %132 = vmatprep.subr.bf16.mxu0 0
  %133 = vmatpush1.bf16.xpose.msra.mxu0 %v130
  %134 = vmatprep.subr.bf16.mxu0 0
  %135 = vmatpush1.bf16.xpose.msra.mxu0 0
  %136 = vmatprep.subr.bf16.mxu0 0
  %137 = vmatpush1.bf16.xpose.msra.mxu0 0
  %138 = vmatprep.subr.bf16.mxu0 0
  %139 = vmatpush1.bf16.xpose.msra.mxu0 0
  %140 = vmatprep.subr.bf16.mxu0 0
  %141 = vmatpush1.bf16.xpose.msra.mxu0 0
  %142 = vmatprep.subr.bf16.mxu0 0
  %143 = vmatpush1.bf16.xpose.msra.mxu0 0
  %144 = vmatprep.subr.bf16.mxu0 0
  %145 = vmatpush1.bf16.xpose.msra.mxu0 0
  %146 = vmatprep.subr.bf16.mxu0 0
  %147 = vmatpush1.bf16.xpose.msra.mxu0 0
  %148 = vmatprep.subr.bf16.mxu0 0
  %149 = vmatpush1.bf16.xpose.msra.mxu0 0
  %150 = vmatprep.subr.bf16.mxu0 0
  %151 = vmatpush1.bf16.xpose.msra.mxu0 0
  %152 = vmatprep.subr.bf16.mxu0 0
  %153 = vmatpush1.bf16.xpose.msra.mxu0 0
  %154 = vmatprep.subr.bf16.mxu0 0
  %155 = vmatpush1.bf16.xpose.msra.mxu0 0
  %156 = vmatprep.subr.bf16.mxu0 0
  %157 = vmatpush1.bf16.xpose.msra.mxu0 0
  %158 = vmatprep.subr.bf16.mxu0 0
  %159 = vmatpush1.bf16.xpose.msra.mxu0 0
  %160 = vmatprep.subr.bf16.mxu0 0
  %161 = vmatpush1.bf16.xpose.msra.mxu0 0
  %162 = vmatprep.subr.bf16.mxu0 0
  %163 = vmatpush1.bf16.xpose.msra.mxu0 0
  %164 = vmatprep.mubr.bf16.mxu0 0
  %165 = vmatmul.mubr.bf16.gmra.mrb[0].mxu0 %v82
  %v166 = vpop.f32.mrb[0].mxu0
  %v167 = vadd.f32 %v73, %v166
  %v168 = vpop.f32.mrb[0].mxu0
  %v169 = vpop.f32.mrb[0].mxu0
  %v170 = vadd.f32 %v73, %v169
  %v171 = vpop.f32.mrb[0].mxu0
  %172 = vmatprep.mubr.bf16.mxu0 0
  %173 = vmatmul.mubr.bf16.gmra.mrb[0].mxu0 %v85
  %v174 = vpop.f32.mrb[0].mxu0
  %v175 = vadd.f32 %v73, %v174
  %v176 = vpop.f32.mrb[0].mxu0
  %v177 = vpop.f32.mrb[0].mxu0
  %v178 = vadd.f32 %v73, %v177
  %v179 = vpop.f32.mrb[0].mxu0
  %180 = vmatprep.mubr.bf16.mxu0 0
  %181 = vmatmul.mubr.bf16.gmra.mrb[0].mxu0 %v88
  %v182 = vpop.f32.mrb[0].mxu0
  %v183 = vadd.f32 %v73, %v182
  %v184 = vpop.f32.mrb[0].mxu0
  %v185 = vpop.f32.mrb[0].mxu0
  %v186 = vadd.f32 %v73, %v185
  %v187 = vpop.f32.mrb[0].mxu0
  %188 = vmatprep.mubr.bf16.mxu0 0
  %189 = vmatmul.mubr.bf16.gmra.mrb[0].mxu0 %v91
  %v190 = vpop.f32.mrb[0].mxu0
  %v191 = vadd.f32 %v73, %v190
  %v192 = vpop.f32.mrb[0].mxu0
  %v193 = vpop.f32.mrb[0].mxu0
  %v194 = vadd.f32 %v73, %v193
  %v195 = vpop.f32.mrb[0].mxu0
  %196 = vmatprep.mubr.bf16.mxu0 0
  %197 = vmatmul.mubr.bf16.gmra.mrb[0].mxu0 %v94
  %v198 = vpop.f32.mrb[0].mxu0
  %v199 = vadd.f32 %v73, %v198
  %v200 = vpop.f32.mrb[0].mxu0
  %v201 = vpop.f32.mrb[0].mxu0
  %v202 = vadd.f32 %v73, %v201
  %v203 = vpop.f32.mrb[0].mxu0
  %204 = vmatprep.mubr.bf16.mxu0 0
  %205 = vmatmul.mubr.bf16.gmra.mrb[0].mxu0 %v97
  %v206 = vpop.f32.mrb[0].mxu0
  %v207 = vadd.f32 %v73, %v206
  %v208 = vpop.f32.mrb[0].mxu0
  %v209 = vpop.f32.mrb[0].mxu0
  %v210 = vadd.f32 %v73, %v209
  %v211 = vpop.f32.mrb[0].mxu0
  %212 = vmatprep.mubr.bf16.mxu0 0
  %213 = vmatmul.mubr.bf16.gmra.mrb[0].mxu0 %v100
  %v214 = vpop.f32.mrb[0].mxu0
  %v215 = vadd.f32 %v73, %v214
  %v216 = vpop.f32.mrb[0].mxu0
  %v217 = vpop.f32.mrb[0].mxu0
  %v218 = vadd.f32 %v73, %v217
  %v219 = vpop.f32.mrb[0].mxu0
  %220 = vmatprep.mubr.bf16.mxu0 0
  %221 = vmatmul.mubr.bf16.gmra.mrb[0].mxu0 %v103
  %v222 = vpop.f32.mrb[0].mxu0
  %v223 = vadd.f32 %v73, %v222
  %v224 = vpop.f32.mrb[0].mxu0
  %v225 = vpop.f32.mrb[0].mxu0
  %v226 = vadd.f32 %v73, %v225
  %v227 = vpop.f32.mrb[0].mxu0
  %228 = vmatprep.mubr.bf16.mxu0 0
  %229 = vmatmul.mubr.bf16.gmra.mrb[0].mxu0 %v106
  %v230 = vpop.f32.mrb[0].mxu0
  %v231 = vadd.f32 %v73, %v230
  %v232 = vpop.f32.mrb[0].mxu0
  %v233 = vpop.f32.mrb[0].mxu0
  %v234 = vadd.f32 %v73, %v233
  %v235 = vpop.f32.mrb[0].mxu0
  %236 = vmatprep.mubr.bf16.mxu0 0
  %237 = vmatmul.mubr.bf16.gmra.mrb[0].mxu0 %v109
  %v238 = vpop.f32.mrb[0].mxu0
  %v239 = vadd.f32 %v73, %v238
  %v240 = vpop.f32.mrb[0].mxu0
  %v241 = vpop.f32.mrb[0].mxu0
  %v242 = vadd.f32 %v73, %v241
  %v243 = vpop.f32.mrb[0].mxu0
  %244 = vmatprep.mubr.bf16.mxu0 0
  %245 = vmatmul.mubr.bf16.gmra.mrb[0].mxu0 %v112
  %v246 = vpop.f32.mrb[0].mxu0
  %v247 = vadd.f32 %v73, %v246
  %v248 = vpop.f32.mrb[0].mxu0
  %v249 = vpop.f32.mrb[0].mxu0
  %v250 = vadd.f32 %v73, %v249
  %v251 = vpop.f32.mrb[0].mxu0
  %252 = vmatprep.mubr.bf16.mxu0 0
  %253 = vmatmul.mubr.bf16.gmra.mrb[0].mxu0 %v115
  %v254 = vpop.f32.mrb[0].mxu0
  %v255 = vadd.f32 %v73, %v254
  %v256 = vpop.f32.mrb[0].mxu0
  %v257 = vpop.f32.mrb[0].mxu0
  %v258 = vadd.f32 %v73, %v257
  %v259 = vpop.f32.mrb[0].mxu0
  %260 = vmatprep.mubr.bf16.mxu0 0
  %261 = vmatmul.mubr.bf16.gmra.mrb[0].mxu0 %v118
  %v262 = vpop.f32.mrb[0].mxu0
  %v263 = vadd.f32 %v73, %v262
  %v264 = vpop.f32.mrb[0].mxu0
  %v265 = vpop.f32.mrb[0].mxu0
  %v266 = vadd.f32 %v73, %v265
  %v267 = vpop.f32.mrb[0].mxu0
  %268 = vmatprep.mubr.bf16.mxu0 0
  %269 = vmatmul.mubr.bf16.gmra.mrb[0].mxu0 %v121
  %v270 = vpop.f32.mrb[0].mxu0
  %v271 = vadd.f32 %v73, %v270
  %v272 = vpop.f32.mrb[0].mxu0
  %v273 = vpop.f32.mrb[0].mxu0
  %v274 = vadd.f32 %v73, %v273
  %v275 = vpop.f32.mrb[0].mxu0
  %276 = vmatprep.mubr.bf16.mxu0 0
  %277 = vmatmul.mubr.bf16.gmra.mrb[0].mxu0 %v124
  %v278 = vpop.f32.mrb[0].mxu0
  %v279 = vadd.f32 %v73, %v278
  %v280 = vpop.f32.mrb[0].mxu0
  %v281 = vpop.f32.mrb[0].mxu0
  %v282 = vadd.f32 %v73, %v281
  %v283 = vpop.f32.mrb[0].mxu0
  %284 = vmatprep.mubr.bf16.mxu0 0
  %285 = vmatmul.mubr.bf16.gmra.mrb[0].mxu0 %v127
  %v286 = vpop.f32.mrb[0].mxu0
  %v287 = vadd.f32 %v73, %v286
  %v288 = vpop.f32.mrb[0].mxu0
  %v289 = vpop.f32.mrb[0].mxu0
  %v290 = vadd.f32 %v73, %v289
  %v291 = vpop.f32.mrb[0].mxu0
  %292 = vdwg.mxu0
  %v293 = vpack.c.bf16 %v170, %v167
  %v294 = vpack.c.bf16 %v178, %v175
  %v295 = vpack.c.bf16 %v186, %v183
  %v296 = vpack.c.bf16 %v194, %v191
  %v297 = vpack.c.bf16 %v202, %v199
  %v298 = vpack.c.bf16 %v210, %v207
  %v299 = vpack.c.bf16 %v218, %v215
  %v300 = vpack.c.bf16 %v226, %v223
  %v301 = vpack.c.bf16 %v234, %v231
  %v302 = vpack.c.bf16 %v242, %v239
  %v303 = vpack.c.bf16 %v250, %v247
  %v304 = vpack.c.bf16 %v258, %v255
  %v305 = vpack.c.bf16 %v266, %v263
  %v306 = vpack.c.bf16 %v274, %v271
  %v307 = vpack.c.bf16 %v282, %v279
  %v308 = vpack.c.bf16 %v290, %v287
  %v309 = vld [vmem:[%s3] sm:$0x1]
  %v311 = vlaneseq
  %v312 = vshrl.u32 %v311, 7
  %v313 = vsub.s32 0, %v312
  %v314 = vrot.slane %v309, %v313
  %vm317 = vcmask 130048
  %v319 = vsel %vm317, %v293, 0
  %v322 = vsel %vm317, %v294, 0
  %v325 = vsel %vm317, %v295, 0
  %v328 = vsel %vm317, %v296, 0
  %v331 = vsel %vm317, %v297, 0
  %v334 = vsel %vm317, %v298, 0
  %v337 = vsel %vm317, %v299, 0
  %v340 = vsel %vm317, %v300, 0
  %v343 = vsel %vm317, %v301, 0
  %v346 = vsel %vm317, %v302, 0
  %v349 = vsel %vm317, %v303, 0
  %v352 = vsel %vm317, %v304, 0
  %v355 = vsel %vm317, %v305, 0
  %v358 = vsel %vm317, %v306, 0
  %v361 = vsel %vm317, %v307, 0
  %v364 = vsel %vm317, %v308, 0
  %366 = vmatprep.subr.bf16.mxu0 0
  %367 = vmatpush1.bf16.msra.mxu0 %v79
  %368 = vmatprep.subr.bf16.mxu0 0
  %369 = vmatpush1.bf16.msra.mxu0 0
  %370 = vmatprep.subr.bf16.mxu0 0
  %371 = vmatpush1.bf16.msra.mxu0 0
  %372 = vmatprep.subr.bf16.mxu0 0
  %373 = vmatpush1.bf16.msra.mxu0 0
  %374 = vmatprep.subr.bf16.mxu0 0
  %375 = vmatpush1.bf16.msra.mxu0 0
  %376 = vmatprep.subr.bf16.mxu0 0
  %377 = vmatpush1.bf16.msra.mxu0 0
  %378 = vmatprep.subr.bf16.mxu0 0
  %379 = vmatpush1.bf16.msra.mxu0 0
  %380 = vmatprep.subr.bf16.mxu0 0
  %381 = vmatpush1.bf16.msra.mxu0 0
  %382 = vmatprep.subr.bf16.mxu0 0
  %383 = vmatpush1.bf16.msra.mxu0 0
  %384 = vmatprep.subr.bf16.mxu0 0
  %385 = vmatpush1.bf16.msra.mxu0 0
  %386 = vmatprep.subr.bf16.mxu0 0
  %387 = vmatpush1.bf16.msra.mxu0 0
  %388 = vmatprep.subr.bf16.mxu0 0
  %389 = vmatpush1.bf16.msra.mxu0 0
  %390 = vmatprep.subr.bf16.mxu0 0
  %391 = vmatpush1.bf16.msra.mxu0 0
  %392 = vmatprep.subr.bf16.mxu0 0
  %393 = vmatpush1.bf16.msra.mxu0 0
  %394 = vmatprep.subr.bf16.mxu0 0
  %395 = vmatpush1.bf16.msra.mxu0 0
  %396 = vmatprep.subr.bf16.mxu0 0
  %397 = vmatpush1.bf16.msra.mxu0 0
  %398 = vmatprep.mubr.bf16.mxu0 0
  %399 = vmatmul.mubr.bf16.gmra.mrb[0].mxu0 %v319
  %v400 = vpop.f32.mrb[0].mxu0
  %v401 = vadd.f32 %v314, %v400
  %v402 = vpop.f32.mrb[0].mxu0
  %v403 = vpop.f32.mrb[0].mxu0
  %v404 = vadd.f32 %v314, %v403
  %v405 = vpop.f32.mrb[0].mxu0
  %406 = vmatprep.mubr.bf16.mxu0 0
  %407 = vmatmul.mubr.bf16.gmra.mrb[0].mxu0 %v322
  %v408 = vpop.f32.mrb[0].mxu0
  %v409 = vadd.f32 %v314, %v408
  %v410 = vpop.f32.mrb[0].mxu0
  %v411 = vpop.f32.mrb[0].mxu0
  %v412 = vadd.f32 %v314, %v411
  %v413 = vpop.f32.mrb[0].mxu0
  %414 = vmatprep.mubr.bf16.mxu0 0
  %415 = vmatmul.mubr.bf16.gmra.mrb[0].mxu0 %v325
  %v416 = vpop.f32.mrb[0].mxu0
  %v417 = vadd.f32 %v314, %v416
  %v418 = vpop.f32.mrb[0].mxu0
  %v419 = vpop.f32.mrb[0].mxu0
  %v420 = vadd.f32 %v314, %v419
  %v421 = vpop.f32.mrb[0].mxu0
  %422 = vmatprep.mubr.bf16.mxu0 0
  %423 = vmatmul.mubr.bf16.gmra.mrb[0].mxu0 %v328
  %v424 = vpop.f32.mrb[0].mxu0
  %v425 = vadd.f32 %v314, %v424
  %v426 = vpop.f32.mrb[0].mxu0
  %v427 = vpop.f32.mrb[0].mxu0
  %v428 = vadd.f32 %v314, %v427
  %v429 = vpop.f32.mrb[0].mxu0
  %430 = vmatprep.mubr.bf16.mxu0 0
  %431 = vmatmul.mubr.bf16.gmra.mrb[0].mxu0 %v331
  %v432 = vpop.f32.mrb[0].mxu0
  %v433 = vadd.f32 %v314, %v432
  %v434 = vpop.f32.mrb[0].mxu0
  %v435 = vpop.f32.mrb[0].mxu0
  %v436 = vadd.f32 %v314, %v435
  %v437 = vpop.f32.mrb[0].mxu0
  %438 = vmatprep.mubr.bf16.mxu0 0
  %439 = vmatmul.mubr.bf16.gmra.mrb[0].mxu0 %v334
  %v440 = vpop.f32.mrb[0].mxu0
  %v441 = vadd.f32 %v314, %v440
  %v442 = vpop.f32.mrb[0].mxu0
  %v443 = vpop.f32.mrb[0].mxu0
  %v444 = vadd.f32 %v314, %v443
  %v445 = vpop.f32.mrb[0].mxu0
  %446 = vmatprep.mubr.bf16.mxu0 0
  %447 = vmatmul.mubr.bf16.gmra.mrb[0].mxu0 %v337
  %v448 = vpop.f32.mrb[0].mxu0
  %v449 = vadd.f32 %v314, %v448
  %v450 = vpop.f32.mrb[0].mxu0
  %v451 = vpop.f32.mrb[0].mxu0
  %v452 = vadd.f32 %v314, %v451
  %v453 = vpop.f32.mrb[0].mxu0
  %454 = vmatprep.mubr.bf16.mxu0 0
  %455 = vmatmul.mubr.bf16.gmra.mrb[0].mxu0 %v340
  %v456 = vpop.f32.mrb[0].mxu0
  %v457 = vadd.f32 %v314, %v456
  %v458 = vpop.f32.mrb[0].mxu0
  %v459 = vpop.f32.mrb[0].mxu0
  %v460 = vadd.f32 %v314, %v459
  %v461 = vpop.f32.mrb[0].mxu0
  %462 = vmatprep.mubr.bf16.mxu0 0
  %463 = vmatmul.mubr.bf16.gmra.mrb[0].mxu0 %v343
  %v464 = vpop.f32.mrb[0].mxu0
  %v465 = vadd.f32 %v314, %v464
  %v466 = vpop.f32.mrb[0].mxu0
  %v467 = vpop.f32.mrb[0].mxu0
  %v468 = vadd.f32 %v314, %v467
  %v469 = vpop.f32.mrb[0].mxu0
  %470 = vmatprep.mubr.bf16.mxu0 0
  %471 = vmatmul.mubr.bf16.gmra.mrb[0].mxu0 %v346
  %v472 = vpop.f32.mrb[0].mxu0
  %v473 = vadd.f32 %v314, %v472
  %v474 = vpop.f32.mrb[0].mxu0
  %v475 = vpop.f32.mrb[0].mxu0
  %v476 = vadd.f32 %v314, %v475
  %v477 = vpop.f32.mrb[0].mxu0
  %478 = vmatprep.mubr.bf16.mxu0 0
  %479 = vmatmul.mubr.bf16.gmra.mrb[0].mxu0 %v349
  %v480 = vpop.f32.mrb[0].mxu0
  %v481 = vadd.f32 %v314, %v480
  %v482 = vpop.f32.mrb[0].mxu0
  %v483 = vpop.f32.mrb[0].mxu0
  %v484 = vadd.f32 %v314, %v483
  %v485 = vpop.f32.mrb[0].mxu0
  %486 = vmatprep.mubr.bf16.mxu0 0
  %487 = vmatmul.mubr.bf16.gmra.mrb[0].mxu0 %v352
  %v488 = vpop.f32.mrb[0].mxu0
  %v489 = vadd.f32 %v314, %v488
  %v490 = vpop.f32.mrb[0].mxu0
  %v491 = vpop.f32.mrb[0].mxu0
  %v492 = vadd.f32 %v314, %v491
  %v493 = vpop.f32.mrb[0].mxu0
  %494 = vmatprep.mubr.bf16.mxu0 0
  %495 = vmatmul.mubr.bf16.gmra.mrb[0].mxu0 %v355
  %v496 = vpop.f32.mrb[0].mxu0
  %v497 = vadd.f32 %v314, %v496
  %v498 = vpop.f32.mrb[0].mxu0
  %v499 = vpop.f32.mrb[0].mxu0
  %v500 = vadd.f32 %v314, %v499
  %v501 = vpop.f32.mrb[0].mxu0
  %502 = vmatprep.mubr.bf16.mxu0 0
  %503 = vmatmul.mubr.bf16.gmra.mrb[0].mxu0 %v358
  %v504 = vpop.f32.mrb[0].mxu0
  %v505 = vadd.f32 %v314, %v504
  %v506 = vpop.f32.mrb[0].mxu0
  %v507 = vpop.f32.mrb[0].mxu0
  %v508 = vadd.f32 %v314, %v507
  %v509 = vpop.f32.mrb[0].mxu0
  %510 = vmatprep.mubr.bf16.mxu0 0
  %511 = vmatmul.mubr.bf16.gmra.mrb[0].mxu0 %v361
  %v512 = vpop.f32.mrb[0].mxu0
  %v513 = vadd.f32 %v314, %v512
  %v514 = vpop.f32.mrb[0].mxu0
  %v515 = vpop.f32.mrb[0].mxu0
  %v516 = vadd.f32 %v314, %v515
  %v517 = vpop.f32.mrb[0].mxu0
  %518 = vmatprep.mubr.bf16.mxu0 0
  %519 = vmatmul.mubr.bf16.gmra.mrb[0].mxu0 %v364
  %v520 = vpop.f32.mrb[0].mxu0
  %v521 = vadd.f32 %v314, %v520
  %v522 = vpop.f32.mrb[0].mxu0
  %v523 = vpop.f32.mrb[0].mxu0
  %v524 = vadd.f32 %v314, %v523
  %v525 = vpop.f32.mrb[0].mxu0
  %526 = vdwg.mxu0
  %v527 = vmax.f32 %v401, 0.0
  %v528 = vmax.f32 %v404, 0.0
  %v529 = vmax.f32 %v409, 0.0
  %v530 = vmax.f32 %v412, 0.0
  %v531 = vmax.f32 %v417, 0.0
  %v532 = vmax.f32 %v420, 0.0
  %v533 = vmax.f32 %v425, 0.0
  %v534 = vmax.f32 %v428, 0.0
  %v535 = vmax.f32 %v433, 0.0
  %v536 = vmax.f32 %v436, 0.0
  %v537 = vmax.f32 %v441, 0.0
  %v538 = vmax.f32 %v444, 0.0
  %v539 = vmax.f32 %v449, 0.0
  %v540 = vmax.f32 %v452, 0.0
  %v541 = vmax.f32 %v457, 0.0
  %v542 = vmax.f32 %v460, 0.0
  %v543 = vmax.f32 %v465, 0.0
  %v544 = vmax.f32 %v468, 0.0
  %v545 = vmax.f32 %v473, 0.0
  %v546 = vmax.f32 %v476, 0.0
  %v547 = vmax.f32 %v481, 0.0
  %v548 = vmax.f32 %v484, 0.0
  %v549 = vmax.f32 %v489, 0.0
  %v550 = vmax.f32 %v492, 0.0
  %v551 = vmax.f32 %v497, 0.0
  %v552 = vmax.f32 %v500, 0.0
  %v553 = vmax.f32 %v505, 0.0
  %v554 = vmax.f32 %v508, 0.0
  %v555 = vmax.f32 %v513, 0.0
  %v556 = vmax.f32 %v516, 0.0
  %v557 = vmax.f32 %v521, 0.0
  %v558 = vmax.f32 %v524, 0.0
  %559 = vst.msk [vmem:[%s4] sm:$0xff] %vm80, %v527
  %560 = vst.msk [vmem:[%s4 + $0x8] sm:$0xff] %vm80, %v528
  %561 = vst.msk [vmem:[%s4 + $0x10] sm:$0xff] %vm80, %v529
  %562 = vst.msk [vmem:[%s4 + $0x18] sm:$0xff] %vm80, %v530
  %563 = vst.msk [vmem:[%s4 + $0x20] sm:$0xff] %vm80, %v531
  %564 = vst.msk [vmem:[%s4 + $0x28] sm:$0xff] %vm80, %v532
  %565 = vst.msk [vmem:[%s4 + $0x30] sm:$0xff] %vm80, %v533
  %566 = vst.msk [vmem:[%s4 + $0x38] sm:$0xff] %vm80, %v534
  %567 = vst.msk [vmem:[%s4 + $0x40] sm:$0xff] %vm80, %v535
  %568 = vst.msk [vmem:[%s4 + $0x48] sm:$0xff] %vm80, %v536
  %569 = vst.msk [vmem:[%s4 + $0x50] sm:$0xff] %vm80, %v537
  %570 = vst.msk [vmem:[%s4 + $0x58] sm:$0xff] %vm80, %v538
  %571 = vst.msk [vmem:[%s4 + $0x60] sm:$0xff] %vm80, %v539
  %572 = vst.msk [vmem:[%s4 + $0x68] sm:$0xff] %vm80, %v540
  %573 = vst.msk [vmem:[%s4 + $0x70] sm:$0xff] %vm80, %v541
  %574 = vst.msk [vmem:[%s4 + $0x78] sm:$0xff] %vm80, %v542
  %575 = vst.msk [vmem:[%s4 + $0x80] sm:$0xff] %vm80, %v543
  %576 = vst.msk [vmem:[%s4 + $0x88] sm:$0xff] %vm80, %v544
  %577 = vst.msk [vmem:[%s4 + $0x90] sm:$0xff] %vm80, %v545
  %578 = vst.msk [vmem:[%s4 + $0x98] sm:$0xff] %vm80, %v546
  %579 = vst.msk [vmem:[%s4 + $0xa0] sm:$0xff] %vm80, %v547
  %580 = vst.msk [vmem:[%s4 + $0xa8] sm:$0xff] %vm80, %v548
  %581 = vst.msk [vmem:[%s4 + $0xb0] sm:$0xff] %vm80, %v549
  %582 = vst.msk [vmem:[%s4 + $0xb8] sm:$0xff] %vm80, %v550
  %583 = vst.msk [vmem:[%s4 + $0xc0] sm:$0xff] %vm80, %v551
  %584 = vst.msk [vmem:[%s4 + $0xc8] sm:$0xff] %vm80, %v552
  %585 = vst.msk [vmem:[%s4 + $0xd0] sm:$0xff] %vm80, %v553
  %586 = vst.msk [vmem:[%s4 + $0xd8] sm:$0xff] %vm80, %v554
  %587 = vst.msk [vmem:[%s4 + $0xe0] sm:$0xff] %vm80, %v555
  %588 = vst.msk [vmem:[%s4 + $0xe8] sm:$0xff] %vm80, %v556
  %589 = vst.msk [vmem:[%s4 + $0xf0] sm:$0xff] %vm80, %v557
  %590 = vst.msk [vmem:[%s4 + $0xf8] sm:$0xff] %vm80, %v558
  // Predicated region
  $region18: #{tpu_custom_call.1} parent=0 // pred_check
    _
  $region19: #{tpu_custom_call.1} parent=0 // pred_check_branch
    %592 = sbr.rel (0) target = $region21
  $region20: #{tpu_custom_call.1} parent=0 // pred_region
    _
  $region21: #{tpu_custom_call.1} parent=0 // pred_fallthru
    _
  // Predicated region
  $region22: #{tpu_custom_call.1} parent=0 // pred_check
    _
  $region23: #{tpu_custom_call.1} parent=0 // pred_check_branch
    %594 = sbr.rel (0) target = $region25
  $region24: #{tpu_custom_call.1} parent=0 // pred_region
    _
  $region25: #{tpu_custom_call.1} parent=0 // pred_fallthru
    _

// kernel: tpu_custom_call.1
$region0: #{tpu_custom_call.1}
  #allocation0 [shape = 'u32[]', space=smem, size = 0x4, offset = 0x4, fixed_abs, tag = 'smem constant byte address 0x4 - core index']
  #allocation1 [shape = 'u32[144,128]{1,0:T(1,128)}', space=vmem, size = 0x12000, scoped, tag = 'internal scratch']
  %s0 = inlined_call_operand.vmem [shape: f32[256,32], index: 0, kind: input, shape index: {}]
  %s1 = inlined_call_operand.vmem [shape: bf16[16,32], index: 1, kind: input, shape index: {}]
  %s2 = inlined_call_operand.vmem [shape: f32[1,16], index: 2, kind: input, shape index: {}]
  %s3 = inlined_call_operand.vmem [shape: f32[1,32], index: 3, kind: input, shape index: {}]
  %s4 = inlined_call_operand.vmem [shape: f32[256,32], index: 4, kind: output, shape index: {}]
  %s5 = sld [smem:[#allocation0]]
  $region26: #{tpu_custom_call.1} parent=0
    _
  %s7 = ssub.s32 1, %s5
  %s8 = scalar_select 0, %s7, %s5
  // Predicated region
  $region2: #{tpu_custom_call.1} parent=0 // pred_check
    _
  $region3: #{tpu_custom_call.1} parent=0 // pred_check_branch
    %10 = sbr.rel (0) target = $region5
  $region4: #{tpu_custom_call.1} parent=0 // pred_region
    _
  $region5: #{tpu_custom_call.1} parent=0 // pred_fallthru
    _
  // Predicated region
  $region6: #{tpu_custom_call.1} parent=0 // pred_check
    _
  $region7: #{tpu_custom_call.1} parent=0 // pred_check_branch
    %12 = sbr.rel (0) target = $region9
  $region8: #{tpu_custom_call.1} parent=0 // pred_region
    _
  $region9: #{tpu_custom_call.1} parent=0 // pred_fallthru
    _
  // Predicated region
  $region10: #{tpu_custom_call.1} parent=0 // pred_check
    _
  $region11: #{tpu_custom_call.1} parent=0 // pred_check_branch
    %14 = sbr.rel (0) target = $region13
  $region12: #{tpu_custom_call.1} parent=0 // pred_region
    _
  $region13: #{tpu_custom_call.1} parent=0 // pred_fallthru
    _
  // Predicated region
  $region14: #{tpu_custom_call.1} parent=0 // pred_check
    _
  $region15: #{tpu_custom_call.1} parent=0 // pred_check_branch
    %16 = sbr.rel (0) target = $region17
  $region16: #{tpu_custom_call.1} parent=0 // pred_region
    _
  $region17: #{tpu_custom_call.1} parent=0 // pred_fallthru
    _
  %v18 = vld [vmem:[%s1] sm:$0xf]
  %v19 = vld [vmem:[%s1 + $0x4] sm:$0xf]
  %v20 = vld [vmem:[%s0] sm:$0xff]
  %v21 = vld [vmem:[%s0 + $0x8] sm:$0xff]
  %v22 = vld [vmem:[%s0 + $0x10] sm:$0xff]
  %v23 = vld [vmem:[%s0 + $0x18] sm:$0xff]
  %v24 = vld [vmem:[%s0 + $0x20] sm:$0xff]
  %v25 = vld [vmem:[%s0 + $0x28] sm:$0xff]
  %v26 = vld [vmem:[%s0 + $0x30] sm:$0xff]
  %v27 = vld [vmem:[%s0 + $0x38] sm:$0xff]
  %v28 = vld [vmem:[%s0 + $0x40] sm:$0xff]
  %v29 = vld [vmem:[%s0 + $0x48] sm:$0xff]
  %v30 = vld [vmem:[%s0 + $0x50] sm:$0xff]
  %v31 = vld [vmem:[%s0 + $0x58] sm:$0xff]
  %v32 = vld [vmem:[%s0 + $0x60] sm:$0xff]
  %v33 = vld [vmem:[%s0 + $0x68] sm:$0xff]
  %v34 = vld [vmem:[%s0 + $0x70] sm:$0xff]
  %v35 = vld [vmem:[%s0 + $0x78] sm:$0xff]
  %v36 = vld [vmem:[%s0 + $0x80] sm:$0xff]
  %v37 = vld [vmem:[%s0 + $0x88] sm:$0xff]
  %v38 = vld [vmem:[%s0 + $0x90] sm:$0xff]
  %v39 = vld [vmem:[%s0 + $0x98] sm:$0xff]
  %v40 = vld [vmem:[%s0 + $0xa0] sm:$0xff]
  %v41 = vld [vmem:[%s0 + $0xa8] sm:$0xff]
  %v42 = vld [vmem:[%s0 + $0xb0] sm:$0xff]
  %v43 = vld [vmem:[%s0 + $0xb8] sm:$0xff]
  %v44 = vld [vmem:[%s0 + $0xc0] sm:$0xff]
  %v45 = vld [vmem:[%s0 + $0xc8] sm:$0xff]
  %v46 = vld [vmem:[%s0 + $0xd0] sm:$0xff]
  %v47 = vld [vmem:[%s0 + $0xd8] sm:$0xff]
  %v48 = vld [vmem:[%s0 + $0xe0] sm:$0xff]
  %v49 = vld [vmem:[%s0 + $0xe8] sm:$0xff]
  %v50 = vld [vmem:[%s0 + $0xf0] sm:$0xff]
  %v51 = vld [vmem:[%s0 + $0xf8] sm:$0xff]
  %v52 = vpack.c.bf16 %v21, %v20
  %v53 = vpack.c.bf16 %v23, %v22
  %v54 = vpack.c.bf16 %v25, %v24
  %v55 = vpack.c.bf16 %v27, %v26
  %v56 = vpack.c.bf16 %v29, %v28
  %v57 = vpack.c.bf16 %v31, %v30
  %v58 = vpack.c.bf16 %v33, %v32
  %v59 = vpack.c.bf16 %v35, %v34
  %v60 = vpack.c.bf16 %v37, %v36
  %v61 = vpack.c.bf16 %v39, %v38
  %v62 = vpack.c.bf16 %v41, %v40
  %v63 = vpack.c.bf16 %v43, %v42
  %v64 = vpack.c.bf16 %v45, %v44
  %v65 = vpack.c.bf16 %v47, %v46
  %v66 = vpack.c.bf16 %v49, %v48
  %v67 = vpack.c.bf16 %v51, %v50
  %v68 = vld [vmem:[%s2] sm:$0x1]
  %v70 = vlaneseq
  %v71 = vshrl.u32 %v70, 7
  %v72 = vsub.s32 0, %v71
  %v73 = vrot.slane %v68, %v72
  %v77 = vunpack.c.l.b16 %v18
  %v78 = vunpack.c.l.b16 %v19
  %v79 = vpack.c.b16 %v78, %v77
  %vm80 = vcmask 261120
  %v82 = vsel %vm80, %v52, 0
  %v85 = vsel %vm80, %v53, 0
  %v88 = vsel %vm80, %v54, 0
  %v91 = vsel %vm80, %v55, 0
  %v94 = vsel %vm80, %v56, 0
  %v97 = vsel %vm80, %v57, 0
  %v100 = vsel %vm80, %v58, 0
  %v103 = vsel %vm80, %v59, 0
  %v106 = vsel %vm80, %v60, 0
  %v109 = vsel %vm80, %v61, 0
  %v112 = vsel %vm80, %v62, 0
  %v115 = vsel %vm80, %v63, 0
  %v118 = vsel %vm80, %v64, 0
  %v121 = vsel %vm80, %v65, 0
  %v124 = vsel %vm80, %v66, 0
  %v127 = vsel %vm80, %v67, 0
  %v130 = vsel %vm80, %v79, 0
  %132 = vmatprep.subr.bf16.mxu0 0
  %133 = vmatpush1.bf16.xpose.msra.mxu0 %v130
  %134 = vmatprep.subr.bf16.mxu0 0
  %135 = vmatpush1.bf16.xpose.msra.mxu0 0
  %136 = vmatprep.subr.bf16.mxu0 0
  %137 = vmatpush1.bf16.xpose.msra.mxu0 0
  %138 = vmatprep.subr.bf16.mxu0 0
  %139 = vmatpush1.bf16.xpose.msra.mxu0 0
  %140 = vmatprep.subr.bf16.mxu0 0
  %141 = vmatpush1.bf16.xpose.msra.mxu0 0
  %142 = vmatprep.subr.bf16.mxu0 0
  %143 = vmatpush1.bf16.xpose.msra.mxu0 0
  %144 = vmatprep.subr.bf16.mxu0 0
  %145 = vmatpush1.bf16.xpose.msra.mxu0 0
  %146 = vmatprep.subr.bf16.mxu0 0
  %147 = vmatpush1.bf16.xpose.msra.mxu0 0
  %148 = vmatprep.subr.bf16.mxu0 0
  %149 = vmatpush1.bf16.xpose.msra.mxu0 0
  %150 = vmatprep.subr.bf16.mxu0 0
  %151 = vmatpush1.bf16.xpose.msra.mxu0 0
  %152 = vmatprep.subr.bf16.mxu0 0
  %153 = vmatpush1.bf16.xpose.msra.mxu0 0
  %154 = vmatprep.subr.bf16.mxu0 0
  %155 = vmatpush1.bf16.xpose.msra.mxu0 0
  %156 = vmatprep.subr.bf16.mxu0 0
  %157 = vmatpush1.bf16.xpose.msra.mxu0 0
  %158 = vmatprep.subr.bf16.mxu0 0
  %159 = vmatpush1.bf16.xpose.msra.mxu0 0
  %160 = vmatprep.subr.bf16.mxu0 0
  %161 = vmatpush1.bf16.xpose.msra.mxu0 0
  %162 = vmatprep.subr.bf16.mxu0 0
  %163 = vmatpush1.bf16.xpose.msra.mxu0 0
  %164 = vmatprep.mubr.bf16.mxu0 0
  %165 = vmatmul.mubr.bf16.gmra.mrb[0].mxu0 %v82
  %v166 = vpop.f32.mrb[0].mxu0
  %v167 = vadd.f32 %v73, %v166
  %v168 = vpop.f32.mrb[0].mxu0
  %v169 = vpop.f32.mrb[0].mxu0
  %v170 = vadd.f32 %v73, %v169
  %v171 = vpop.f32.mrb[0].mxu0
  %172 = vmatprep.mubr.bf16.mxu0 0
  %173 = vmatmul.mubr.bf16.gmra.mrb[0].mxu0 %v85
  %v174 = vpop.f32.mrb[0].mxu0
  %v175 = vadd.f32 %v73, %v174
  %v176 = vpop.f32.mrb[0].mxu0
  %v177 = vpop.f32.mrb[0].mxu0
  %v178 = vadd.f32 %v73, %v177
  %v179 = vpop.f32.mrb[0].mxu0
  %180 = vmatprep.mubr.bf16.mxu0 0
  %181 = vmatmul.mubr.bf16.gmra.mrb[0].mxu0 %v88
  %v182 = vpop.f32.mrb[0].mxu0
  %v183 = vadd.f32 %v73, %v182
  %v184 = vpop.f32.mrb[0].mxu0
  %v185 = vpop.f32.mrb[0].mxu0
  %v186 = vadd.f32 %v73, %v185
  %v187 = vpop.f32.mrb[0].mxu0
  %188 = vmatprep.mubr.bf16.mxu0 0
  %189 = vmatmul.mubr.bf16.gmra.mrb[0].mxu0 %v91
  %v190 = vpop.f32.mrb[0].mxu0
  %v191 = vadd.f32 %v73, %v190
  %v192 = vpop.f32.mrb[0].mxu0
  %v193 = vpop.f32.mrb[0].mxu0
  %v194 = vadd.f32 %v73, %v193
  %v195 = vpop.f32.mrb[0].mxu0
  %196 = vmatprep.mubr.bf16.mxu0 0
  %197 = vmatmul.mubr.bf16.gmra.mrb[0].mxu0 %v94
  %v198 = vpop.f32.mrb[0].mxu0
  %v199 = vadd.f32 %v73, %v198
  %v200 = vpop.f32.mrb[0].mxu0
  %v201 = vpop.f32.mrb[0].mxu0
  %v202 = vadd.f32 %v73, %v201
  %v203 = vpop.f32.mrb[0].mxu0
  %204 = vmatprep.mubr.bf16.mxu0 0
  %205 = vmatmul.mubr.bf16.gmra.mrb[0].mxu0 %v97
  %v206 = vpop.f32.mrb[0].mxu0
  %v207 = vadd.f32 %v73, %v206
  %v208 = vpop.f32.mrb[0].mxu0
  %v209 = vpop.f32.mrb[0].mxu0
  %v210 = vadd.f32 %v73, %v209
  %v211 = vpop.f32.mrb[0].mxu0
  %212 = vmatprep.mubr.bf16.mxu0 0
  %213 = vmatmul.mubr.bf16.gmra.mrb[0].mxu0 %v100
  %v214 = vpop.f32.mrb[0].mxu0
  %v215 = vadd.f32 %v73, %v214
  %v216 = vpop.f32.mrb[0].mxu0
  %v217 = vpop.f32.mrb[0].mxu0
  %v218 = vadd.f32 %v73, %v217
  %v219 = vpop.f32.mrb[0].mxu0
  %220 = vmatprep.mubr.bf16.mxu0 0
  %221 = vmatmul.mubr.bf16.gmra.mrb[0].mxu0 %v103
  %v222 = vpop.f32.mrb[0].mxu0
  %v223 = vadd.f32 %v73, %v222
  %v224 = vpop.f32.mrb[0].mxu0
  %v225 = vpop.f32.mrb[0].mxu0
  %v226 = vadd.f32 %v73, %v225
  %v227 = vpop.f32.mrb[0].mxu0
  %228 = vmatprep.mubr.bf16.mxu0 0
  %229 = vmatmul.mubr.bf16.gmra.mrb[0].mxu0 %v106
  %v230 = vpop.f32.mrb[0].mxu0
  %v231 = vadd.f32 %v73, %v230
  %v232 = vpop.f32.mrb[0].mxu0
  %v233 = vpop.f32.mrb[0].mxu0
  %v234 = vadd.f32 %v73, %v233
  %v235 = vpop.f32.mrb[0].mxu0
  %236 = vmatprep.mubr.bf16.mxu0 0
  %237 = vmatmul.mubr.bf16.gmra.mrb[0].mxu0 %v109
  %v238 = vpop.f32.mrb[0].mxu0
  %v239 = vadd.f32 %v73, %v238
  %v240 = vpop.f32.mrb[0].mxu0
  %v241 = vpop.f32.mrb[0].mxu0
  %v242 = vadd.f32 %v73, %v241
  %v243 = vpop.f32.mrb[0].mxu0
  %244 = vmatprep.mubr.bf16.mxu0 0
  %245 = vmatmul.mubr.bf16.gmra.mrb[0].mxu0 %v112
  %v246 = vpop.f32.mrb[0].mxu0
  %v247 = vadd.f32 %v73, %v246
  %v248 = vpop.f32.mrb[0].mxu0
  %v249 = vpop.f32.mrb[0].mxu0
  %v250 = vadd.f32 %v73, %v249
  %v251 = vpop.f32.mrb[0].mxu0
  %252 = vmatprep.mubr.bf16.mxu0 0
  %253 = vmatmul.mubr.bf16.gmra.mrb[0].mxu0 %v115
  %v254 = vpop.f32.mrb[0].mxu0
  %v255 = vadd.f32 %v73, %v254
  %v256 = vpop.f32.mrb[0].mxu0
  %v257 = vpop.f32.mrb[0].mxu0
  %v258 = vadd.f32 %v73, %v257
  %v259 = vpop.f32.mrb[0].mxu0
  %260 = vmatprep.mubr.bf16.mxu0 0
  %261 = vmatmul.mubr.bf16.gmra.mrb[0].mxu0 %v118
  %v262 = vpop.f32.mrb[0].mxu0
  %v263 = vadd.f32 %v73, %v262
  %v264 = vpop.f32.mrb[0].mxu0
  %v265 = vpop.f32.mrb[0].mxu0
  %v266 = vadd.f32 %v73, %v265
  %v267 = vpop.f32.mrb[0].mxu0
  %268 = vmatprep.mubr.bf16.mxu0 0
  %269 = vmatmul.mubr.bf16.gmra.mrb[0].mxu0 %v121
  %v270 = vpop.f32.mrb[0].mxu0
  %v271 = vadd.f32 %v73, %v270
  %v272 = vpop.f32.mrb[0].mxu0
  %v273 = vpop.f32.mrb[0].mxu0
  %v274 = vadd.f32 %v73, %v273
  %v275 = vpop.f32.mrb[0].mxu0
  %276 = vmatprep.mubr.bf16.mxu0 0
  %277 = vmatmul.mubr.bf16.gmra.mrb[0].mxu0 %v124
  %v278 = vpop.f32.mrb[0].mxu0
  %v279 = vadd.f32 %v73, %v278
  %v280 = vpop.f32.mrb[0].mxu0
  %v281 = vpop.f32.mrb[0].mxu0
  %v282 = vadd.f32 %v73, %v281
  %v283 = vpop.f32.mrb[0].mxu0
  %284 = vmatprep.mubr.bf16.mxu0 0
  %285 = vmatmul.mubr.bf16.gmra.mrb[0].mxu0 %v127
  %v286 = vpop.f32.mrb[0].mxu0
  %v287 = vadd.f32 %v73, %v286
  %v288 = vpop.f32.mrb[0].mxu0
  %v289 = vpop.f32.mrb[0].mxu0
  %v290 = vadd.f32 %v73, %v289
  %v291 = vpop.f32.mrb[0].mxu0
  %292 = vdwg.mxu0
  %v293 = vpack.c.bf16 %v170, %v167
  %v294 = vpack.c.bf16 %v178, %v175
  %v295 = vpack.c.bf16 %v186, %v183
  %v296 = vpack.c.bf16 %v194, %v191
  %v297 = vpack.c.bf16 %v202, %v199
  %v298 = vpack.c.bf16 %v210, %v207
  %v299 = vpack.c.bf16 %v218, %v215
  %v300 = vpack.c.bf16 %v226, %v223
  %v301 = vpack.c.bf16 %v234, %v231
  %v302 = vpack.c.bf16 %v242, %v239
  %v303 = vpack.c.bf16 %v250, %v247
  %v304 = vpack.c.bf16 %v258, %v255
  %v305 = vpack.c.bf16 %v266, %v263
  %v306 = vpack.c.bf16 %v274, %v271
  %v307 = vpack.c.bf16 %v282, %v279
  %v308 = vpack.c.bf16 %v290, %v287
  %v309 = vld [vmem:[%s3] sm:$0x1]
  %v311 = vlaneseq
  %v312 = vshrl.u32 %v311, 7
  %v313 = vsub.s32 0, %v312
  %v314 = vrot.slane %v309, %v313
  %vm317 = vcmask 130048
  %v319 = vsel %vm317, %v293, 0
  %v322 = vsel %vm317, %v294, 0
  %v325 = vsel %vm317, %v295, 0
  %v328 = vsel %vm317, %v296, 0
  %v331 = vsel %vm317, %v297, 0
  %v334 = vsel %vm317, %v298, 0
  %v337 = vsel %vm317, %v299, 0
  %v340 = vsel %vm317, %v300, 0
  %v343 = vsel %vm317, %v301, 0
  %v346 = vsel %vm317, %v302, 0
  %v349 = vsel %vm317, %v303, 0
  %v352 = vsel %vm317, %v304, 0
  %v355 = vsel %vm317, %v305, 0
  %v358 = vsel %vm317, %v306, 0
  %v361 = vsel %vm317, %v307, 0
  %v364 = vsel %vm317, %v308, 0
  %366 = vmatprep.subr.bf16.mxu0 0
  %367 = vmatpush1.bf16.msra.mxu0 %v79
  %368 = vmatprep.subr.bf16.mxu0 0
  %369 = vmatpush1.bf16.msra.mxu0 0
  %370 = vmatprep.subr.bf16.mxu0 0
  %371 = vmatpush1.bf16.msra.mxu0 0
  %372 = vmatprep.subr.bf16.mxu0 0
  %373 = vmatpush1.bf16.msra.mxu0 0
  %374 = vmatprep.subr.bf16.mxu0 0
  %375 = vmatpush1.bf16.msra.mxu0 0
  %376 = vmatprep.subr.bf16.mxu0 0
  %377 = vmatpush1.bf16.msra.mxu0 0
  %378 = vmatprep.subr.bf16.mxu0 0
  %379 = vmatpush1.bf16.msra.mxu0 0
  %380 = vmatprep.subr.bf16.mxu0 0
  %381 = vmatpush1.bf16.msra.mxu0 0
  %382 = vmatprep.subr.bf16.mxu0 0
  %383 = vmatpush1.bf16.msra.mxu0 0
  %384 = vmatprep.subr.bf16.mxu0 0
  %385 = vmatpush1.bf16.msra.mxu0 0
  %386 = vmatprep.subr.bf16.mxu0 0
  %387 = vmatpush1.bf16.msra.mxu0 0
  %388 = vmatprep.subr.bf16.mxu0 0
  %389 = vmatpush1.bf16.msra.mxu0 0
  %390 = vmatprep.subr.bf16.mxu0 0
  %391 = vmatpush1.bf16.msra.mxu0 0
  %392 = vmatprep.subr.bf16.mxu0 0
  %393 = vmatpush1.bf16.msra.mxu0 0
  %394 = vmatprep.subr.bf16.mxu0 0
  %395 = vmatpush1.bf16.msra.mxu0 0
  %396 = vmatprep.subr.bf16.mxu0 0
  %397 = vmatpush1.bf16.msra.mxu0 0
  %398 = vmatprep.mubr.bf16.mxu0 0
  %399 = vmatmul.mubr.bf16.gmra.mrb[0].mxu0 %v319
  %v400 = vpop.f32.mrb[0].mxu0
  %v401 = vadd.f32 %v314, %v400
  %v402 = vpop.f32.mrb[0].mxu0
  %v403 = vpop.f32.mrb[0].mxu0
  %v404 = vadd.f32 %v314, %v403
  %v405 = vpop.f32.mrb[0].mxu0
  %406 = vmatprep.mubr.bf16.mxu0 0
  %407 = vmatmul.mubr.bf16.gmra.mrb[0].mxu0 %v322
  %v408 = vpop.f32.mrb[0].mxu0
  %v409 = vadd.f32 %v314, %v408
  %v410 = vpop.f32.mrb[0].mxu0
  %v411 = vpop.f32.mrb[0].mxu0
  %v412 = vadd.f32 %v314, %v411
  %v413 = vpop.f32.mrb[0].mxu0
  %414 = vmatprep.mubr.bf16.mxu0 0
  %415 = vmatmul.mubr.bf16.gmra.mrb[0].mxu0 %v325
  %v416 = vpop.f32.mrb[0].mxu0
  %v417 = vadd.f32 %v314, %v416
  %v418 = vpop.f32.mrb[0].mxu0
  %v419 = vpop.f32.mrb[0].mxu0
  %v420 = vadd.f32 %v314, %v419
  %v421 = vpop.f32.mrb[0].mxu0
  %422 = vmatprep.mubr.bf16.mxu0 0
  %423 = vmatmul.mubr.bf16.gmra.mrb[0].mxu0 %v328
  %v424 = vpop.f32.mrb[0].mxu0
  %v425 = vadd.f32 %v314, %v424
  %v426 = vpop.f32.mrb[0].mxu0
  %v427 = vpop.f32.mrb[0].mxu0
  %v428 = vadd.f32 %v314, %v427
  %v429 = vpop.f32.mrb[0].mxu0
  %430 = vmatprep.mubr.bf16.mxu0 0
  %431 = vmatmul.mubr.bf16.gmra.mrb[0].mxu0 %v331
  %v432 = vpop.f32.mrb[0].mxu0
  %v433 = vadd.f32 %v314, %v432
  %v434 = vpop.f32.mrb[0].mxu0
  %v435 = vpop.f32.mrb[0].mxu0
  %v436 = vadd.f32 %v314, %v435
  %v437 = vpop.f32.mrb[0].mxu0
  %438 = vmatprep.mubr.bf16.mxu0 0
  %439 = vmatmul.mubr.bf16.gmra.mrb[0].mxu0 %v334
  %v440 = vpop.f32.mrb[0].mxu0
  %v441 = vadd.f32 %v314, %v440
  %v442 = vpop.f32.mrb[0].mxu0
  %v443 = vpop.f32.mrb[0].mxu0
  %v444 = vadd.f32 %v314, %v443
  %v445 = vpop.f32.mrb[0].mxu0
  %446 = vmatprep.mubr.bf16.mxu0 0
  %447 = vmatmul.mubr.bf16.gmra.mrb[0].mxu0 %v337
  %v448 = vpop.f32.mrb[0].mxu0
  %v449 = vadd.f32 %v314, %v448
  %v450 = vpop.f32.mrb[0].mxu0
  %v451 = vpop.f32.mrb[0].mxu0
  %v452 = vadd.f32 %v314, %v451
  %v453 = vpop.f32.mrb[0].mxu0
  %454 = vmatprep.mubr.bf16.mxu0 0
  %455 = vmatmul.mubr.bf16.gmra.mrb[0].mxu0 %v340
  %v456 = vpop.f32.mrb[0].mxu0
  %v457 = vadd.f32 %v314, %v456
  %v458 = vpop.f32.mrb[0].mxu0
  %v459 = vpop.f32.mrb[0].mxu0
  %v460 = vadd.f32 %v314, %v459
  %v461 = vpop.f32.mrb[0].mxu0
  %462 = vmatprep.mubr.bf16.mxu0 0
  %463 = vmatmul.mubr.bf16.gmra.mrb[0].mxu0 %v343
  %v464 = vpop.f32.mrb[0].mxu0
  %v465 = vadd.f32 %v314, %v464
  %v466 = vpop.f32.mrb[0].mxu0
  %v467 = vpop.f32.mrb[0].mxu0
  %v468 = vadd.f32 %v314, %v467
  %v469 = vpop.f32.mrb[0].mxu0
  %470 = vmatprep.mubr.bf16.mxu0 0
  %471 = vmatmul.mubr.bf16.gmra.mrb[0].mxu0 %v346
  %v472 = vpop.f32.mrb[0].mxu0
  %v473 = vadd.f32 %v314, %v472
  %v474 = vpop.f32.mrb[0].mxu0
  %v475 = vpop.f32.mrb[0].mxu0
  %v476 = vadd.f32 %v314, %v475
  %v477 = vpop.f32.mrb[0].mxu0
  %478 = vmatprep.mubr.bf16.mxu0 0
  %479 = vmatmul.mubr.bf16.gmra.mrb[0].mxu0 %v349
  %v480 = vpop.f32.mrb[0].mxu0
  %v481 = vadd.f32 %v314, %v480
  %v482 = vpop.f32.mrb[0].mxu0
  %v483 = vpop.f32.mrb[0].mxu0
  %v484 = vadd.f32 %v314, %v483
  %v485 = vpop.f32.mrb[0].mxu0
  %486 = vmatprep.mubr.bf16.mxu0 0
  %487 = vmatmul.mubr.bf16.gmra.mrb[0].mxu0 %v352
  %v488 = vpop.f32.mrb[0].mxu0
  %v489 = vadd.f32 %v314, %v488
  %v490 = vpop.f32.mrb[0].mxu0
  %v491 = vpop.f32.mrb[0].mxu0
  %v492 = vadd.f32 %v314, %v491
  %v493 = vpop.f32.mrb[0].mxu0
  %494 = vmatprep.mubr.bf16.mxu0 0
  %495 = vmatmul.mubr.bf16.gmra.mrb[0].mxu0 %v355
  %v496 = vpop.f32.mrb[0].mxu0
  %v497 = vadd.f32 %v314, %v496
  %v498 = vpop.f32.mrb[0].mxu0
  %v499 = vpop.f32.mrb[0].mxu0
  %v500 = vadd.f32 %v314, %v499
  %v501 = vpop.f32.mrb[0].mxu0
  %502 = vmatprep.mubr.bf16.mxu0 0
  %503 = vmatmul.mubr.bf16.gmra.mrb[0].mxu0 %v358
  %v504 = vpop.f32.mrb[0].mxu0
  %v505 = vadd.f32 %v314, %v504
  %v506 = vpop.f32.mrb[0].mxu0
  %v507 = vpop.f32.mrb[0].mxu0
  %v508 = vadd.f32 %v314, %v507
  %v509 = vpop.f32.mrb[0].mxu0
  %510 = vmatprep.mubr.bf16.mxu0 0
  %511 = vmatmul.mubr.bf16.gmra.mrb[0].mxu0 %v361
  %v512 = vpop.f32.mrb[0].mxu0
  %v513 = vadd.f32 %v314, %v512
  %v514 = vpop.f32.mrb[0].mxu0
  %v515 = vpop.f32.mrb[0].mxu0
  %v516 = vadd.f32 %v314, %v515
  %v517 = vpop.f32.mrb[0].mxu0
  %518 = vmatprep.mubr.bf16.mxu0 0
  %519 = vmatmul.mubr.bf16.gmra.mrb[0].mxu0 %v364
  %v520 = vpop.f32.mrb[0].mxu0
  %v521 = vadd.f32 %v314, %v520
  %v522 = vpop.f32.mrb[0].mxu0
  %v523 = vpop.f32.mrb[0].mxu0
  %v524 = vadd.f32 %v314, %v523
  %v525 = vpop.f32.mrb[0].mxu0
  %526 = vdwg.mxu0
  %v527 = vmax.f32 %v401, 0.0
  %v528 = vmax.f32 %v404, 0.0
  %v529 = vmax.f32 %v409, 0.0
  %v530 = vmax.f32 %v412, 0.0
  %v531 = vmax.f32 %v417, 0.0
  %v532 = vmax.f32 %v420, 0.0
  %v533 = vmax.f32 %v425, 0.0
  %v534 = vmax.f32 %v428, 0.0
  %v535 = vmax.f32 %v433, 0.0
  %v536 = vmax.f32 %v436, 0.0
  %v537 = vmax.f32 %v441, 0.0
  %v538 = vmax.f32 %v444, 0.0
  %v539 = vmax.f32 %v449, 0.0
  %v540 = vmax.f32 %v452, 0.0
  %v541 = vmax.f32 %v457, 0.0
  %v542 = vmax.f32 %v460, 0.0
  %v543 = vmax.f32 %v465, 0.0
  %v544 = vmax.f32 %v468, 0.0
  %v545 = vmax.f32 %v473, 0.0
  %v546 = vmax.f32 %v476, 0.0
  %v547 = vmax.f32 %v481, 0.0
  %v548 = vmax.f32 %v484, 0.0
  %v549 = vmax.f32 %v489, 0.0
  %v550 = vmax.f32 %v492, 0.0
  %v551 = vmax.f32 %v497, 0.0
  %v552 = vmax.f32 %v500, 0.0
  %v553 = vmax.f32 %v505, 0.0
  %v554 = vmax.f32 %v508, 0.0
  %v555 = vmax.f32 %v513, 0.0
  %v556 = vmax.f32 %v516, 0.0
  %v557 = vmax.f32 %v521, 0.0
  %v558 = vmax.f32 %v524, 0.0
  %559 = vst.msk [vmem:[%s4] sm:$0xff] %vm80, %v527
  %560 = vst.msk [vmem:[%s4 + $0x8] sm:$0xff] %vm80, %v528
  %561 = vst.msk [vmem:[%s4 + $0x10] sm:$0xff] %vm80, %v529
  %562 = vst.msk [vmem:[%s4 + $0x18] sm:$0xff] %vm80, %v530
  %563 = vst.msk [vmem:[%s4 + $0x20] sm:$0xff] %vm80, %v531
  %564 = vst.msk [vmem:[%s4 + $0x28] sm:$0xff] %vm80, %v532
  %565 = vst.msk [vmem:[%s4 + $0x30] sm:$0xff] %vm80, %v533
  %566 = vst.msk [vmem:[%s4 + $0x38] sm:$0xff] %vm80, %v534
  %567 = vst.msk [vmem:[%s4 + $0x40] sm:$0xff] %vm80, %v535
  %568 = vst.msk [vmem:[%s4 + $0x48] sm:$0xff] %vm80, %v536
  %569 = vst.msk [vmem:[%s4 + $0x50] sm:$0xff] %vm80, %v537
  %570 = vst.msk [vmem:[%s4 + $0x58] sm:$0xff] %vm80, %v538
  %571 = vst.msk [vmem:[%s4 + $0x60] sm:$0xff] %vm80, %v539
  %572 = vst.msk [vmem:[%s4 + $0x68] sm:$0xff] %vm80, %v540
  %573 = vst.msk [vmem:[%s4 + $0x70] sm:$0xff] %vm80, %v541
  %574 = vst.msk [vmem:[%s4 + $0x78] sm:$0xff] %vm80, %v542
  %575 = vst.msk [vmem:[%s4 + $0x80] sm:$0xff] %vm80, %v543
  %576 = vst.msk [vmem:[%s4 + $0x88] sm:$0xff] %vm80, %v544
  %577 = vst.msk [vmem:[%s4 + $0x90] sm:$0xff] %vm80, %v545
  %578 = vst.msk [vmem:[%s4 + $0x98] sm:$0xff] %vm80, %v546
  %579 = vst.msk [vmem:[%s4 + $0xa0] sm:$0xff] %vm80, %v547
  %580 = vst.msk [vmem:[%s4 + $0xa8] sm:$0xff] %vm80, %v548
  %581 = vst.msk [vmem:[%s4 + $0xb0] sm:$0xff] %vm80, %v549
  %582 = vst.msk [vmem:[%s4 + $0xb8] sm:$0xff] %vm80, %v550
  %583 = vst.msk [vmem:[%s4 + $0xc0] sm:$0xff] %vm80, %v551
  %584 = vst.msk [vmem:[%s4 + $0xc8] sm:$0xff] %vm80, %v552
  %585 = vst.msk [vmem:[%s4 + $0xd0] sm:$0xff] %vm80, %v553
  %586 = vst.msk [vmem:[%s4 + $0xd8] sm:$0xff] %vm80, %v554
  %587 = vst.msk [vmem:[%s4 + $0xe0] sm:$0xff] %vm80, %v555
  %588 = vst.msk [vmem:[%s4 + $0xe8] sm:$0xff] %vm80, %v556
  %589 = vst.msk [vmem:[%s4 + $0xf0] sm:$0xff] %vm80, %v557
  %590 = vst.msk [vmem:[%s4 + $0xf8] sm:$0xff] %vm80, %v558
  // Predicated region
  $region18: #{tpu_custom_call.1} parent=0 // pred_check
    _
  $region19: #{tpu_custom_call.1} parent=0 // pred_check_branch
    %592 = sbr.rel (0) target = $region21
  $region20: #{tpu_custom_call.1} parent=0 // pred_region
    _
  $region21: #{tpu_custom_call.1} parent=0 // pred_fallthru
    _
  // Predicated region
  $region22: #{tpu_custom_call.1} parent=0 // pred_check
    _
  $region23: #{tpu_custom_call.1} parent=0 // pred_check_branch
    %594 = sbr.rel (0) target = $region25
  $region24: #{tpu_custom_call.1} parent=0 // pred_region
    _
  $region25: #{tpu_custom_call.1} parent=0 // pred_fallthru
    _

</llo_original>
